<compile_context>
chip_gen: v7x
topology: tpu7x:2x2x1
jax: 0.10.0
libtpu: 0.0.40
codegen_flags: <defaults>
</compile_context>

<pallas_src>
import functools

import jax
import jax.numpy as jnp
from jax.experimental import pallas as pl
from jax.experimental.pallas import tpu as pltpu

BN_EPS = 1e-5


def _round_up(x, m):
    return (x + m - 1) // m * m


# --------------- Pass 1: per-feature batch statistics (sum, sum of squares) ---------------
def _stats_kernel(x_ref, sum_ref, sumsq_ref, *, batch, tile_b):
    i = pl.program_id(0)

    @pl.when(i == 0)
    def _():
        sum_ref[...] = jnp.zeros_like(sum_ref)
        sumsq_ref[...] = jnp.zeros_like(sumsq_ref)

    x = x_ref[...].astype(jnp.float32)
    if batch % tile_b != 0:  # static decision: mask only if a ragged last tile exists
        row = i * tile_b + jax.lax.broadcasted_iota(jnp.int32, x.shape, 0)
        x = jnp.where(row < batch, x, 0.0)
    sum_ref[...] += jnp.sum(x, axis=0, keepdims=True)
    sumsq_ref[...] += jnp.sum(x * x, axis=0, keepdims=True)


# --------------- Pass 2: fused (BN-folded) Linear -> ReLU -> Linear -> sigmoid ---------------
def _mlp_kernel(x_ref, w1_ref, b1_ref, w2_ref, b2_ref, o_ref):
    x = x_ref[...].astype(jnp.float32)

    # Linear1 (BatchNorm already folded into w1/b1) + ReLU
    h = jnp.dot(x, w1_ref[...], preferred_element_type=jnp.float32) + b1_ref[...]
    h = jnp.maximum(h, 0.0)

    # Linear2 expressed as (1, H) x (TILE_B, H)^T -> lane-dense (1, TILE_B) row
    y = jax.lax.dot_general(
        w2_ref[...], h,
        dimension_numbers=(((1,), (1,)), ((), ())),
        preferred_element_type=jnp.float32,
    )
    y = y + b2_ref[0, 0]  # scalar bias from SMEM
    o_ref[...] = jax.nn.sigmoid(y).reshape(o_ref.shape)


@jax.jit
def nn_forward(x, gamma, beta, w1, b1, w2, b2):
    B, F = x.shape
    H = w1.shape[1]
    h_pad = _round_up(H, 64)
    tile_b = max(8, min(512, _round_up(B, 8)))
    num_tiles = pl.cdiv(B, tile_b)

    # ---- Pass 1: global batch statistics (training-mode BatchNorm) ----
    s, ss = pl.pallas_call(
        functools.partial(_stats_kernel, batch=B, tile_b=tile_b),
        out_shape=(jax.ShapeDtypeStruct((1, F), jnp.float32),
                   jax.ShapeDtypeStruct((1, F), jnp.float32)),
        grid=(num_tiles,),
        in_specs=[pl.BlockSpec((tile_b, F), lambda i: (i, 0))],
        out_specs=(pl.BlockSpec((1, F), lambda i: (0, 0)),
                   pl.BlockSpec((1, F), lambda i: (0, 0))),
        compiler_params=pltpu.CompilerParams(dimension_semantics=("arbitrary",)),
    )(x)

    # ---- Tiny one-off fold (O(F*H)) done in JAX, not per tile ----
    mean = s / B
    var = ss / B - mean * mean                  # biased variance (BN training normalizer)
    a = gamma * jax.lax.rsqrt(var + BN_EPS)     # (1, F)
    c = beta - mean * a                         # (1, F)
    w1f = a.reshape(F, 1) * w1                  # (F, H)
    b1f = b1 + c @ w1                           # (1, H)

    # Zero-pad hidden to a lane-friendly size; zero b1/w2 padding keeps output exact.
    pad = h_pad - H
    w1f = jnp.pad(w1f, ((0, 0), (0, pad)))
    b1f = jnp.pad(b1f, ((0, 0), (0, pad)))
    w2r = jnp.pad(w2.reshape(1, H), ((0, 0), (0, pad)))   # (1, h_pad)

    # ---- Pass 2: streaming batch-tiled kernel, lane-dense output ----
    out = pl.pallas_call(
        _mlp_kernel,
        out_shape=jax.ShapeDtypeStruct((num_tiles, 1, tile_b), jnp.float32),
        grid=(num_tiles,),
        in_specs=[
            pl.BlockSpec((tile_b, F), lambda i: (i, 0)),          # x tile (pipelined)
            pl.BlockSpec((F, h_pad), lambda i: (0, 0)),           # folded W1 (resident)
            pl.BlockSpec((1, h_pad), lambda i: (0, 0)),           # folded b1 (resident)
            pl.BlockSpec((1, h_pad), lambda i: (0, 0)),           # w2 row (resident)
            pl.BlockSpec(memory_space=pltpu.MemorySpace.SMEM),    # b2 scalar
        ],
        out_specs=pl.BlockSpec((1, 1, tile_b), lambda i: (i, 0, 0)),
        compiler_params=pltpu.CompilerParams(dimension_semantics=("parallel",)),
    )(x, w1f, b1f, w2r, b2)

    # Rows beyond B (ragged last tile) are discarded here; matches .view(-1).
    return out.reshape(-1)[:B]


def init_params(key, input_size, hidden=50):
    k1, k2, k3, k4 = jax.random.split(key, 4)
    # BatchNorm1d affine params (PyTorch default: weight=1, bias=0)
    gamma = jnp.ones((1, input_size), jnp.float32)
    beta = jnp.zeros((1, input_size), jnp.float32)
    # Linear(input_size, hidden): PyTorch default uniform(-1/sqrt(fan_in), +)
    bound1 = 1.0 / (input_size ** 0.5)
    w1 = jax.random.uniform(k1, (input_size, hidden), jnp.float32, -bound1, bound1)
    b1 = jax.random.uniform(k2, (1, hidden), jnp.float32, -bound1, bound1)
    # Linear(hidden, 1)
    bound2 = 1.0 / (hidden ** 0.5)
    w2 = jax.random.uniform(k3, (hidden, 1), jnp.float32, -bound2, bound2)
    b2 = jax.random.uniform(k4, (1, 1), jnp.float32, -bound2, bound2)
    return gamma, beta, w1, b1, w2, b2


def _reference(x, gamma, beta, w1, b1, w2, b2):
    mean = jnp.mean(x, axis=0, keepdims=True)
    var = jnp.mean((x - mean) ** 2, axis=0, keepdims=True)
    xn = (x - mean) * jax.lax.rsqrt(var + BN_EPS) * gamma + beta
    h = jnp.maximum(xn @ w1 + b1, 0.0)
    return jax.nn.sigmoid(h @ w2 + b2).reshape(-1)


if __name__ == "__main__":
    key = jax.random.PRNGKey(0)
    kx, kp = jax.random.split(key)

    batch, input_size = 8, 32
    x = jax.random.normal(kx, (batch, input_size), jnp.float32)
    params = init_params(kp, input_size)

    out = nn_forward(x, *params)
    jax.block_until_ready(out)

    assert out.shape == (batch,)
    assert bool(jnp.all((out >= 0.0) & (out <= 1.0)))

    ref = _reference(x, *params)
    assert bool(jnp.allclose(out, ref, rtol=1e-4, atol=2e-5)), (out, ref)

    print("KERNEL_OK")
</pallas_src>

<mosaic_0001>
module attributes {stable_mosaic.version = 11 : i64} {
  func.func @_stats_kernel(%arg0: i32, %arg1: memref<8x32xf32, #tpu.memory_space<vmem>>, %arg2: memref<1x32xf32, #tpu.memory_space<vmem>>, %arg3: memref<1x32xf32, #tpu.memory_space<vmem>>) attributes {dimension_semantics = [#tpu.dimension_semantics<arbitrary>], iteration_bounds = array<i64: 1>, scalar_prefetch = 0 : i64, scratch_operands = 0 : i64, tpu.core_type = #tpu.core_type<tc>, window_params = [{transform_indices = @transform_0, window_bounds = array<i64: 8, 32>}, {pipeline_mode = #tpu.pipeline_mode<synchronous>, transform_indices = @transform_1, window_bounds = array<i64: 1, 32>}, {pipeline_mode = #tpu.pipeline_mode<synchronous>, transform_indices = @transform_2, window_bounds = array<i64: 1, 32>}]} {
    %c0_i32 = arith.constant 0 : i32
    %0 = arith.cmpi eq, %arg0, %c0_i32 : i32
    %1 = arith.extui %0 : i1 to i32
    %c0_i32_0 = arith.constant 0 : i32
    %2 = arith.cmpi ne, %1, %c0_i32_0 : i32
    scf.if %2 {
      %cst_11 = arith.constant 0.000000e+00 : f32
      %15 = vector.broadcast %cst_11 : f32 to vector<1x32xf32>
      %c0_12 = arith.constant 0 : index
      %c0_13 = arith.constant 0 : index
      %16 = vector.load %arg2[%c0_12, %c0_13] : memref<1x32xf32, #tpu.memory_space<vmem>>, vector<1x32xf32>
      tpu.vector_store %arg2[%c0_12, %c0_13], %15 {strides = array<i32>} : memref<1x32xf32, #tpu.memory_space<vmem>>, vector<1x32xf32>,
      %cst_14 = arith.constant 0.000000e+00 : f32
      %17 = vector.broadcast %cst_14 : f32 to vector<1x32xf32>
      %c0_15 = arith.constant 0 : index
      %c0_16 = arith.constant 0 : index
      %18 = vector.load %arg3[%c0_15, %c0_16] : memref<1x32xf32, #tpu.memory_space<vmem>>, vector<1x32xf32>
      tpu.vector_store %arg3[%c0_15, %c0_16], %17 {strides = array<i32>} : memref<1x32xf32, #tpu.memory_space<vmem>>, vector<1x32xf32>,
    } else {
    }
    %c0 = arith.constant 0 : index
    %c0_1 = arith.constant 0 : index
    %3 = vector.load %arg1[%c0, %c0_1] : memref<8x32xf32, #tpu.memory_space<vmem>>, vector<8x32xf32>
    %c0_2 = arith.constant 0 : index
    %c0_3 = arith.constant 0 : index
    %4 = vector.load %arg2[%c0_2, %c0_3] : memref<1x32xf32, #tpu.memory_space<vmem>>, vector<1x32xf32>
    %cst = arith.constant dense<0.000000e+00> : vector<32xf32>
    %5 = vector.multi_reduction <add>, %3, %cst [0] : vector<8x32xf32> to vector<32xf32>
    %6 = vector.shape_cast %5 : vector<32xf32> to vector<1x32xf32>
    %7 = arith.addf %4, %6 : vector<1x32xf32>
    %c0_4 = arith.constant 0 : index
    %c0_5 = arith.constant 0 : index
    %8 = vector.load %arg2[%c0_4, %c0_5] : memref<1x32xf32, #tpu.memory_space<vmem>>, vector<1x32xf32>
    tpu.vector_store %arg2[%c0_4, %c0_5], %7 {strides = array<i32>} : memref<1x32xf32, #tpu.memory_space<vmem>>, vector<1x32xf32>,
    %c0_6 = arith.constant 0 : index
    %c0_7 = arith.constant 0 : index
    %9 = vector.load %arg3[%c0_6, %c0_7] : memref<1x32xf32, #tpu.memory_space<vmem>>, vector<1x32xf32>
    %10 = arith.mulf %3, %3 : vector<8x32xf32>
    %cst_8 = arith.constant dense<0.000000e+00> : vector<32xf32>
    %11 = vector.multi_reduction <add>, %10, %cst_8 [0] : vector<8x32xf32> to vector<32xf32>
    %12 = vector.shape_cast %11 : vector<32xf32> to vector<1x32xf32>
    %13 = arith.addf %9, %12 : vector<1x32xf32>
    %c0_9 = arith.constant 0 : index
    %c0_10 = arith.constant 0 : index
    %14 = vector.load %arg3[%c0_9, %c0_10] : memref<1x32xf32, #tpu.memory_space<vmem>>, vector<1x32xf32>
    tpu.vector_store %arg3[%c0_9, %c0_10], %13 {strides = array<i32>} : memref<1x32xf32, #tpu.memory_space<vmem>>, vector<1x32xf32>,
    return
  }
  func.func @transform_0(%arg0: i32) -> (i32, i32) {
    %c0_i32 = arith.constant 0 : i32
    %c0_i32_0 = arith.constant 0 : i32
    return %arg0, %c0_i32 : i32, i32
  }
  func.func @transform_1(%arg0: i32) -> (i32, i32) {
    %c0_i32 = arith.constant 0 : i32
    %c0_i32_0 = arith.constant 0 : i32
    %c0_i32_1 = arith.constant 0 : i32
    return %c0_i32, %c0_i32_0 : i32, i32
  }
  func.func @transform_2(%arg0: i32) -> (i32, i32) {
    %c0_i32 = arith.constant 0 : i32
    %c0_i32_0 = arith.constant 0 : i32
    %c0_i32_1 = arith.constant 0 : i32
    return %c0_i32, %c0_i32_0 : i32, i32
  }
}

module attributes {stable_mosaic.version = 11 : i64} {
  func.func @_mlp_kernel(%arg0: i32, %arg1: memref<8x32xf32, #tpu.memory_space<vmem>>, %arg2: memref<32x64xf32, #tpu.memory_space<vmem>>, %arg3: memref<1x64xf32, #tpu.memory_space<vmem>>, %arg4: memref<1x64xf32, #tpu.memory_space<vmem>>, %arg5: memref<1x1xf32, #tpu.memory_space<smem>>, %arg6: memref<1x1x8xf32, #tpu.memory_space<vmem>>) attributes {dimension_semantics = [#tpu.dimension_semantics<parallel>], iteration_bounds = array<i64: 1>, scalar_prefetch = 0 : i64, scratch_operands = 0 : i64, tpu.core_type = #tpu.core_type<tc>, window_params = [{transform_indices = @transform_0, window_bounds = array<i64: 8, 32>}, {pipeline_mode = #tpu.pipeline_mode<synchronous>, transform_indices = @transform_1, window_bounds = array<i64: 32, 64>}, {pipeline_mode = #tpu.pipeline_mode<synchronous>, transform_indices = @transform_2, window_bounds = array<i64: 1, 64>}, {pipeline_mode = #tpu.pipeline_mode<synchronous>, transform_indices = @transform_3, window_bounds = array<i64: 1, 64>}, {transform_indices = @transform_4, window_bounds = array<i64: 1, 1>}, {transform_indices = @transform_5, window_bounds = array<i64: 1, 1, 8>}]} {
    %c0 = arith.constant 0 : index
    %c0_0 = arith.constant 0 : index
    %0 = vector.load %arg1[%c0, %c0_0] : memref<8x32xf32, #tpu.memory_space<vmem>>, vector<8x32xf32>
    %c0_1 = arith.constant 0 : index
    %c0_2 = arith.constant 0 : index
    %1 = vector.load %arg2[%c0_1, %c0_2] : memref<32x64xf32, #tpu.memory_space<vmem>>, vector<32x64xf32>
    %cst = arith.constant dense<0.000000e+00> : vector<8x64xf32>
    %2 = tpu.matmul %0, %1, %cst {dimension_numbers = #tpu.dot_dimension_numbers<[1], [0], [0], [1], [0, 0, 1, 1], [], []>} : vector<8x32xf32>, vector<32x64xf32>, vector<8x64xf32> -> vector<8x64xf32>
    %c0_3 = arith.constant 0 : index
    %c0_4 = arith.constant 0 : index
    %3 = vector.load %arg3[%c0_3, %c0_4] : memref<1x64xf32, #tpu.memory_space<vmem>>, vector<1x64xf32>
    %4 = vector.broadcast %3 : vector<1x64xf32> to vector<8x64xf32>
    %5 = arith.addf %2, %4 : vector<8x64xf32>
    %cst_5 = arith.constant 0.000000e+00 : f32
    %6 = vector.broadcast %cst_5 : f32 to vector<8x64xf32>
    %7 = arith.maximumf %5, %6 : vector<8x64xf32>
    %c0_6 = arith.constant 0 : index
    %c0_7 = arith.constant 0 : index
    %8 = vector.load %arg4[%c0_6, %c0_7] : memref<1x64xf32, #tpu.memory_space<vmem>>, vector<1x64xf32>
    %cst_8 = arith.constant dense<0.000000e+00> : vector<1x8xf32>
    %9 = tpu.matmul %8, %7, %cst_8 {dimension_numbers = #tpu.dot_dimension_numbers<[1], [1], [0], [0], [0, 0, 1, 0], [], []>} : vector<1x64xf32>, vector<8x64xf32>, vector<1x8xf32> -> vector<1x8xf32>
    %c0_9 = arith.constant 0 : index
    %c0_10 = arith.constant 0 : index
    %10 = memref.load %arg5[%c0_9, %c0_10] : memref<1x1xf32, #tpu.memory_space<smem>>
    %11 = vector.broadcast %10 : f32 to vector<1x8xf32>
    %12 = arith.addf %9, %11 : vector<1x8xf32>
    %13 = arith.negf %12 : vector<1x8xf32>
    %14 = math.exp %13 : vector<1x8xf32>
    %cst_11 = arith.constant 1.000000e+00 : f32
    %15 = vector.broadcast %cst_11 : f32 to vector<1x8xf32>
    %16 = arith.addf %15, %14 : vector<1x8xf32>
    %17 = arith.divf %15, %16 : vector<1x8xf32>
    %18 = vector.shape_cast %17 : vector<1x8xf32> to vector<1x1x8xf32>
    %c0_12 = arith.constant 0 : index
    %c0_13 = arith.constant 0 : index
    %c0_14 = arith.constant 0 : index
    %19 = vector.load %arg6[%c0_12, %c0_13, %c0_14] : memref<1x1x8xf32, #tpu.memory_space<vmem>>, vector<1x1x8xf32>
    tpu.vector_store %arg6[%c0_12, %c0_13, %c0_14], %18 {strides = array<i32>} : memref<1x1x8xf32, #tpu.memory_space<vmem>>, vector<1x1x8xf32>,
    return
  }
  func.func @transform_0(%arg0: i32) -> (i32, i32) {
    %c0_i32 = arith.constant 0 : i32
    %c0_i32_0 = arith.constant 0 : i32
    return %arg0, %c0_i32 : i32, i32
  }
  func.func @transform_1(%arg0: i32) -> (i32, i32) {
    %c0_i32 = arith.constant 0 : i32
    %c0_i32_0 = arith.constant 0 : i32
    %c0_i32_1 = arith.constant 0 : i32
    return %c0_i32, %c0_i32_0 : i32, i32
  }
  func.func @transform_2(%arg0: i32) -> (i32, i32) {
    %c0_i32 = arith.constant 0 : i32
    %c0_i32_0 = arith.constant 0 : i32
    %c0_i32_1 = arith.constant 0 : i32
    return %c0_i32, %c0_i32_0 : i32, i32
  }
  func.func @transform_3(%arg0: i32) -> (i32, i32) {
    %c0_i32 = arith.constant 0 : i32
    %c0_i32_0 = arith.constant 0 : i32
    %c0_i32_1 = arith.constant 0 : i32
    return %c0_i32, %c0_i32_0 : i32, i32
  }
  func.func @transform_4(%arg0: i32) -> (i32, i32) {
    %c0_i32 = arith.constant 0 : i32
    %c0_i32_0 = arith.constant 0 : i32
    %c0_i32_1 = arith.constant 0 : i32
    return %c0_i32, %c0_i32_0 : i32, i32
  }
  func.func @transform_5(%arg0: i32) -> (i32, i32, i32) {
    %c0_i32 = arith.constant 0 : i32
    %c0_i32_0 = arith.constant 0 : i32
    %c0_i32_1 = arith.constant 0 : i32
    return %arg0, %c0_i32, %c0_i32_0 : i32, i32, i32
  }
}

</mosaic_0001>

<llo_original>
// kernel: nn_forward.2
$region0: #{nn_forward.2}
  #allocation0 [shape = 'u32[]', space=smem, size = 0x4, offset = 0x4, fixed_abs, tag = 'smem constant byte address 0x4 - core index']
  #allocation1 [shape = 'u32[144,128]{1,0:T(1,128)}', space=vmem, size = 0x12000, scoped, tag = 'internal scratch']
  %s0 = inlined_call_operand.vmem [shape: f32[8,32], index: 0, kind: input, shape index: {}]
  %s1 = inlined_call_operand.vmem [shape: f32[1,32], index: 1, kind: output, shape index: {0}]
  %s2 = inlined_call_operand.vmem [shape: f32[1,32], index: 2, kind: output, shape index: {1}]
  %3 = xla_tuple %s1, %s2
  %s4 = sld [smem:[#allocation0]]
  $region26: #{nn_forward.2} parent=0
    _
  %s6 = ssub.s32 1, %s4
  %s7 = scalar_select 0, %s6, %s4
  // Predicated region
  $region2: #{nn_forward.2} parent=0 // pred_check
    _
  $region3: #{nn_forward.2} parent=0 // pred_check_branch
    %9 = sbr.rel (0) target = $region5
  $region4: #{nn_forward.2} parent=0 // pred_region
    _
  $region5: #{nn_forward.2} parent=0 // pred_fallthru
    _
  %p10 = scmp.eq.s32.totalorder 0, 0
  // Predicated region
  $region6: #{nn_forward.2} parent=0 // pred_check
    %p11 = pneg %p10
  $region7: #{nn_forward.2} parent=0 // pred_check_branch
    %13 = sbr.rel (%p11) target = $region9
  $region8: #{nn_forward.2} parent=0 // pred_region
    %vm14 = vcmask 253952
    %15 = vst.msk [vmem:[%s1] sm:$0x1] %vm14, 0.0
    %16 = vst.msk [vmem:[%s2] sm:$0x1] %vm14, 0.0
  $region9: #{nn_forward.2} parent=0 // pred_fallthru
    _
  %v17 = vld [vmem:[%s0] sm:$0xff]
  %v18 = vld [vmem:[%s1] sm:$0x1]
  %vm19 = vcmask 261120
  %v20 = vsel %vm19, %v17, 0.0
  %v21 = vrot.slane %v20, 4
  %v22 = vadd.f32 %v20, %v21
  %v23 = vrot.slane %v22, 2
  %v24 = vadd.f32 %v22, %v23
  %v25 = vrot.slane %v24, 1
  %v26 = vadd.f32 %v24, %v25
  %v27 = vadd.f32 %v18, %v26
  %vm28 = vcmask 253952
  %29 = vst.msk [vmem:[%s1] sm:$0x1] %vm28, %v27
  %v30 = vld [vmem:[%s2] sm:$0x1]
  %v31 = vmul.f32 %v17, %v17
  %v32 = vsel %vm19, %v31, 0.0
  %v33 = vrot.slane %v32, 4
  %v34 = vadd.f32 %v32, %v33
  %v35 = vrot.slane %v34, 2
  %v36 = vadd.f32 %v34, %v35
  %v37 = vrot.slane %v36, 1
  %v38 = vadd.f32 %v36, %v37
  %v39 = vadd.f32 %v30, %v38
  %40 = vst.msk [vmem:[%s2] sm:$0x1] %vm28, %v39
  // Predicated region
  $region10: #{nn_forward.2} parent=0 // pred_check
    _
  $region11: #{nn_forward.2} parent=0 // pred_check_branch
    %42 = sbr.rel (0) target = $region13
  $region12: #{nn_forward.2} parent=0 // pred_region
    _
  $region13: #{nn_forward.2} parent=0 // pred_fallthru
    _
  // Predicated region
  $region14: #{nn_forward.2} parent=0 // pred_check
    _
  $region15: #{nn_forward.2} parent=0 // pred_check_branch
    %44 = sbr.rel (0) target = $region17
  $region16: #{nn_forward.2} parent=0 // pred_region
    _
  $region17: #{nn_forward.2} parent=0 // pred_fallthru
    _
  // Predicated region
  $region18: #{nn_forward.2} parent=0 // pred_check
    _
  $region19: #{nn_forward.2} parent=0 // pred_check_branch
    %46 = sbr.rel (0) target = $region21
  $region20: #{nn_forward.2} parent=0 // pred_region
    _
  $region21: #{nn_forward.2} parent=0 // pred_fallthru
    _
  // Predicated region
  $region22: #{nn_forward.2} parent=0 // pred_check
    _
  $region23: #{nn_forward.2} parent=0 // pred_check_branch
    %48 = sbr.rel (0) target = $region25
  $region24: #{nn_forward.2} parent=0 // pred_region
    _
  $region25: #{nn_forward.2} parent=0 // pred_fallthru
    _

// kernel: nn_forward.3
$region0: #{nn_forward.3}
  #allocation0 [shape = 'u32[]', space=smem, size = 0x4, offset = 0x4, fixed_abs, tag = 'smem constant byte address 0x4 - core index']
  #allocation1 [shape = 'u32[144,128]{1,0:T(1,128)}', space=vmem, size = 0x12000, scoped, tag = 'internal scratch']
  #allocation2 [shape = 'f32[1,1]{1,0:T(1,128)S(6)}', space=smem, size = 0x200, scoped, tag = 'scoped memory for nn_forward.3']
  %s0 = inlined_call_operand.vmem [shape: f32[8,32], index: 0, kind: input, shape index: {}]
  %s1 = inlined_call_operand.vmem [shape: f32[32,64], index: 1, kind: input, shape index: {}]
  %s2 = inlined_call_operand.vmem [shape: f32[1,64], index: 2, kind: input, shape index: {}]
  %s3 = inlined_call_operand.vmem [shape: f32[1,64], index: 3, kind: input, shape index: {}]
  %s4 = inlined_call_operand.<no memory space> [shape: f32[1,1], index: 4, kind: input, shape index: {}]
  %s5 = inlined_call_operand.hbm [shape: f32[1,1,8], index: 5, kind: output, shape index: {}]
  %s6 = sld [smem:[#allocation0]]
  $region30: #{nn_forward.3} parent=0
    _
  %s8 = ssub.s32 1, %s6
  %s9 = scalar_select 0, %s8, %s6
  %10 = sst [smem:[#allocation2]] %s4
  $region1: #{nn_forward.3} parent=0
    #allocation3 [shape = 'u8[512]{0}', space=vmem, size = 0x400, scoped, tag = 'output window, operand 0, single buffered']
    #allocation4 [shape = 's32[1]{0}', space=sflag, size = 0x4, scoped, tag = 'scoped memory for nn_forward.3']
    %11 = vsyncpa [#allocation4], 0
    // Predicated region
    $region2: #{nn_forward.3} parent=1 // pred_check
      _
    $region3: #{nn_forward.3} parent=1 // pred_check_branch
      %13 = sbr.rel (0) target = $region5
    $region4: #{nn_forward.3} parent=1 // pred_region
      _
    $region5: #{nn_forward.3} parent=1 // pred_fallthru
      _
    // Predicated region
    $region6: #{nn_forward.3} parent=1 // pred_check
      _
    $region7: #{nn_forward.3} parent=1 // pred_check_branch
      %15 = sbr.rel (0) target = $region9
    $region8: #{nn_forward.3} parent=1 // pred_region
      _
    $region9: #{nn_forward.3} parent=1 // pred_fallthru
      _
    // Predicated region
    $region10: #{nn_forward.3} parent=1 // pred_check
      _
    $region11: #{nn_forward.3} parent=1 // pred_check_branch
      %17 = sbr.rel (0) target = $region13
    $region12: #{nn_forward.3} parent=1 // pred_region
      _
    $region13: #{nn_forward.3} parent=1 // pred_fallthru
      _
    // Predicated region
    $region14: #{nn_forward.3} parent=1 // pred_check
      _
    $region15: #{nn_forward.3} parent=1 // pred_check_branch
      %19 = sbr.rel (0) target = $region17
    $region16: #{nn_forward.3} parent=1 // pred_region
      _
    $region17: #{nn_forward.3} parent=1 // pred_fallthru
      _
    // Predicated region
    $region18: #{nn_forward.3} parent=1 // pred_check
      _
    $region19: #{nn_forward.3} parent=1 // pred_check_branch
      %21 = sbr.rel (0) target = $region21
    $region20: #{nn_forward.3} parent=1 // pred_region
      _
    $region21: #{nn_forward.3} parent=1 // pred_fallthru
      _
    %v22 = vld [vmem:[%s0] sm:$0xff]
    %v23 = vld [vmem:[%s1] sm:$0xff]
    %v24 = vld [vmem:[%s1 + $0x8] sm:$0xff]
    %v25 = vld [vmem:[%s1 + $0x10] sm:$0xff]
    %v26 = vld [vmem:[%s1 + $0x18] sm:$0xff]
    %v27 = vld [vmem:[%s2] sm:$0x1]
    %v29 = vlaneseq
    %v30 = vshrl.u32 %v29, 7
    %v31 = vsub.s32 0, %v30
    %v32 = vrot.slane %v27, %v31
    %vm34 = vcmask 261120
    %v36 = vsel %vm34, %v22, 0
    %38 = vmatprep.subr.mxu0 0.0
    %39 = vmatpush1.msra.mxu0 %v23
    %40 = vmatprep.subr.mxu0 0.0
    %41 = vmatpush1.msra.mxu0 %v24
    %42 = vmatprep.subr.mxu0 0.0
    %43 = vmatpush1.msra.mxu0 %v25
    %44 = vmatprep.subr.mxu0 0.0
    %45 = vmatpush1.msra.mxu0 %v26
    %46 = vmatprep.subr.mxu0 0.0
    %47 = vmatpush1.msra.mxu0 0.0
    %48 = vmatprep.subr.mxu0 0.0
    %49 = vmatpush1.msra.mxu0 0.0
    %50 = vmatprep.subr.mxu0 0.0
    %51 = vmatpush1.msra.mxu0 0.0
    %52 = vmatprep.subr.mxu0 0.0
    %53 = vmatpush1.msra.mxu0 0.0
    %54 = vmatprep.subr.mxu0 0.0
    %55 = vmatpush1.msra.mxu0 0.0
    %56 = vmatprep.subr.mxu0 0.0
    %57 = vmatpush1.msra.mxu0 0.0
    %58 = vmatprep.subr.mxu0 0.0
    %59 = vmatpush1.msra.mxu0 0.0
    %60 = vmatprep.subr.mxu0 0.0
    %61 = vmatpush1.msra.mxu0 0.0
    %62 = vmatprep.subr.mxu0 0.0
    %63 = vmatpush1.msra.mxu0 0.0
    %64 = vmatprep.subr.mxu0 0.0
    %65 = vmatpush1.msra.mxu0 0.0
    %66 = vmatprep.subr.mxu0 0.0
    %67 = vmatpush1.msra.mxu0 0.0
    %68 = vmatprep.subr.mxu0 0.0
    %69 = vmatpush1.msra.mxu0 0.0
    %70 = vmatprep.subr.mxu0 0.0
    %71 = vmatpush1.msra.mxu0 0.0
    %72 = vmatprep.subr.mxu0 0.0
    %73 = vmatpush1.msra.mxu0 0.0
    %74 = vmatprep.subr.mxu0 0.0
    %75 = vmatpush1.msra.mxu0 0.0
    %76 = vmatprep.subr.mxu0 0.0
    %77 = vmatpush1.msra.mxu0 0.0
    %78 = vmatprep.subr.mxu0 0.0
    %79 = vmatpush1.msra.mxu0 0.0
    %80 = vmatprep.subr.mxu0 0.0
    %81 = vmatpush1.msra.mxu0 0.0
    %82 = vmatprep.subr.mxu0 0.0
    %83 = vmatpush1.msra.mxu0 0.0
    %84 = vmatprep.subr.mxu0 0.0
    %85 = vmatpush1.msra.mxu0 0.0
    %86 = vmatprep.subr.mxu0 0.0
    %87 = vmatpush1.msra.mxu0 0.0
    %88 = vmatprep.subr.mxu0 0.0
    %89 = vmatpush1.msra.mxu0 0.0
    %90 = vmatprep.subr.mxu0 0.0
    %91 = vmatpush1.msra.mxu0 0.0
    %92 = vmatprep.subr.mxu0 0.0
    %93 = vmatpush1.msra.mxu0 0.0
    %94 = vmatprep.subr.mxu0 0.0
    %95 = vmatpush1.msra.mxu0 0.0
    %96 = vmatprep.subr.mxu0 0.0
    %97 = vmatpush1.msra.mxu0 0.0
    %98 = vmatprep.subr.mxu0 0.0
    %99 = vmatpush1.msra.mxu0 0.0
    %100 = vmatprep.subr.mxu0 0.0
    %101 = vmatpush1.msra.mxu0 0.0
    %102 = vmatprep.mubr.f32.mxu0 0.0
    %103 = vmatmul.mubr.f32.gmra.mrb[0].mxu0 %v36
    %v104 = vpop.f32.mrb[0].mxu0
    %v105 = vadd.f32 %v32, %v104
    %v106 = vpop.f32.mrb[0].mxu0
    %107 = vdwg.mxu0
    %v108 = vmax.f32 %v105, 0.0
    %v109 = vld [vmem:[%s3] sm:$0x1]
    %s110 = sld [smem:[#allocation2]]
    %v111 = vstv %s110
    %vm112 = vcmask 523264
    %v114 = vsel %vm112, %v109, 0
    %v117 = vsel %vm112, %v108, 0
    %119 = vmatprep.subr.mxu0 0.0
    %120 = vmatpush1.xpose.msra.mxu0 %v117
    %121 = vmatprep.subr.mxu0 0.0
    %122 = vmatpush1.xpose.msra.mxu0 0.0
    %123 = vmatprep.subr.mxu0 0.0
    %124 = vmatpush1.xpose.msra.mxu0 0.0
    %125 = vmatprep.subr.mxu0 0.0
    %126 = vmatpush1.xpose.msra.mxu0 0.0
    %127 = vmatprep.subr.mxu0 0.0
    %128 = vmatpush1.xpose.msra.mxu0 0.0
    %129 = vmatprep.subr.mxu0 0.0
    %130 = vmatpush1.xpose.msra.mxu0 0.0
    %131 = vmatprep.subr.mxu0 0.0
    %132 = vmatpush1.xpose.msra.mxu0 0.0
    %133 = vmatprep.subr.mxu0 0.0
    %134 = vmatpush1.xpose.msra.mxu0 0.0
    %135 = vmatprep.subr.mxu0 0.0
    %136 = vmatpush1.xpose.msra.mxu0 0.0
    %137 = vmatprep.subr.mxu0 0.0
    %138 = vmatpush1.xpose.msra.mxu0 0.0
    %139 = vmatprep.subr.mxu0 0.0
    %140 = vmatpush1.xpose.msra.mxu0 0.0
    %141 = vmatprep.subr.mxu0 0.0
    %142 = vmatpush1.xpose.msra.mxu0 0.0
    %143 = vmatprep.subr.mxu0 0.0
    %144 = vmatpush1.xpose.msra.mxu0 0.0
    %145 = vmatprep.subr.mxu0 0.0
    %146 = vmatpush1.xpose.msra.mxu0 0.0
    %147 = vmatprep.subr.mxu0 0.0
    %148 = vmatpush1.xpose.msra.mxu0 0.0
    %149 = vmatprep.subr.mxu0 0.0
    %150 = vmatpush1.xpose.msra.mxu0 0.0
    %151 = vmatprep.subr.mxu0 0.0
    %152 = vmatpush1.xpose.msra.mxu0 0.0
    %153 = vmatprep.subr.mxu0 0.0
    %154 = vmatpush1.xpose.msra.mxu0 0.0
    %155 = vmatprep.subr.mxu0 0.0
    %156 = vmatpush1.xpose.msra.mxu0 0.0
    %157 = vmatprep.subr.mxu0 0.0
    %158 = vmatpush1.xpose.msra.mxu0 0.0
    %159 = vmatprep.subr.mxu0 0.0
    %160 = vmatpush1.xpose.msra.mxu0 0.0
    %161 = vmatprep.subr.mxu0 0.0
    %162 = vmatpush1.xpose.msra.mxu0 0.0
    %163 = vmatprep.subr.mxu0 0.0
    %164 = vmatpush1.xpose.msra.mxu0 0.0
    %165 = vmatprep.subr.mxu0 0.0
    %166 = vmatpush1.xpose.msra.mxu0 0.0
    %167 = vmatprep.subr.mxu0 0.0
    %168 = vmatpush1.xpose.msra.mxu0 0.0
    %169 = vmatprep.subr.mxu0 0.0
    %170 = vmatpush1.xpose.msra.mxu0 0.0
    %171 = vmatprep.subr.mxu0 0.0
    %172 = vmatpush1.xpose.msra.mxu0 0.0
    %173 = vmatprep.subr.mxu0 0.0
    %174 = vmatpush1.xpose.msra.mxu0 0.0
    %175 = vmatprep.subr.mxu0 0.0
    %176 = vmatpush1.xpose.msra.mxu0 0.0
    %177 = vmatprep.subr.mxu0 0.0
    %178 = vmatpush1.xpose.msra.mxu0 0.0
    %179 = vmatprep.subr.mxu0 0.0
    %180 = vmatpush1.xpose.msra.mxu0 0.0
    %181 = vmatprep.subr.mxu0 0.0
    %182 = vmatpush1.xpose.msra.mxu0 0.0
    %183 = vmatprep.mubr.f32.mxu0 0.0
    %184 = vmatmul.mubr.f32.gmra.mrb[0].mxu0 %v114
    %v185 = vpop.f32.mrb[0].mxu0
    %v186 = vadd.f32 %v111, %v185
    %v187 = vpop.f32.mrb[0].mxu0
    %188 = vdwg.mxu0
    %v189 = vxor.u32 %v186, 2147483648
    %v190 = vmul.f32 %v189, 1.442695
    %v191 = vpow.pop %v190
    %v192 = vadd.f32 %v191, 1.0
    %v193 = vrcp.pop %v192
    %v194 = vmul.f32 1.0, %v193
    %vm195 = vcmask 57344
    %196 = vst.msk [vmem:[#allocation3] sm:$0x1] %vm195, %v194
    // Predicated region
    $region22: #{nn_forward.3} parent=1 // pred_check
      _
    $region23: #{nn_forward.3} parent=1 // pred_check_branch
      %198 = sbr.rel (0) target = $region25
    $region24: #{nn_forward.3} parent=1 // pred_region
      %s200 = ssub.s32 16, 16
      %201 = vsyncadd [#allocation4], %s200
      %s203 = sshll.u32 [#allocation3], 4
      %s204 = int_to_ptr.vmem [resolvable:$true] %s203
      %206 = dma.vmem_to_hbm [thread:$0]  %s204, 16, %s5, [#allocation4]
    $region25: #{nn_forward.3} parent=1 // pred_fallthru
      _
    // Predicated region
    $region26: #{nn_forward.3} parent=1 // pred_check
      _
    $region27: #{nn_forward.3} parent=1 // pred_check_branch
      %208 = sbr.rel (0) target = $region29
    $region28: #{nn_forward.3} parent=1 // pred_region
      %209 = dma.done [#allocation4], 16
    $region29: #{nn_forward.3} parent=1 // pred_fallthru
      _
    %210 = vsyncpa [#allocation4], 1

</llo_original>
